<compile_context>
chip_gen: v7x
topology: tpu7x:2x2x1
jax: 0.10.0
libtpu: 0.0.40
codegen_flags: <defaults>
</compile_context>

<pallas_src>
import jax
import jax.numpy as jnp
from jax.experimental import pallas as pl
from jax.experimental.pallas import tpu as pltpu


def _fused_kernel(x1_ref, x2_ref, x3_ref, x4_ref, x5_ref, o_ref):
    # out = x1 @ x2 + x3 @ x4 + x5   (all (3,3) f32, each padded into one vreg)
    x1 = x1_ref[...]
    x2 = x2_ref[...]
    x3 = x3_ref[...]
    x4 = x4_ref[...]
    acc = x5_ref[...]
    k_dim = x1.shape[1]  # 3, static
    # Tiny-K contraction as a VPU broadcast-multiply-accumulate (static unroll).
    # The lane/sublane broadcasts go through the otherwise-idle XLU slot, so
    # they co-issue for free; keeping this off the MXU avoids push + result-FIFO
    # pop latency and padded-operand DMA.
    for k in range(k_dim):
        acc = acc + x1[:, k:k + 1] * x2[k:k + 1, :]
        acc = acc + x3[:, k:k + 1] * x4[k:k + 1, :]
    # TODO(synk): training-mode Dropout2d (channel Bernoulli mask + 1/0.9 rescale)
    # not implemented; eval-mode dropout is identity.
    o_ref[...] = acc


@jax.jit
def model_forward(x1, x2, x3, x4, x5):
    # Gridless single invocation: every operand is a whole-array VMEM block.
    vmem = pl.BlockSpec(memory_space=pltpu.MemorySpace.VMEM)
    return pl.pallas_call(
        _fused_kernel,
        out_shape=jax.ShapeDtypeStruct(x5.shape, x5.dtype),
        in_specs=[vmem, vmem, vmem, vmem, vmem],
        out_specs=vmem,
    )(x1, x2, x3, x4, x5)


def model_forward_ref(x1, x2, x3, x4, x5):
    # Pure-JAX reference for correctness check.
    v1 = x1 @ x2
    v2 = x3 @ x4
    v3 = v1 + x5
    v4 = v2 + v3
    return v4  # eval-mode Dropout2d == identity


if __name__ == "__main__":
    key = jax.random.PRNGKey(0)
    k1, k2, k3, k4, k5 = jax.random.split(key, 5)
    # Shapes match the PyTorch script: five (3, 3) float32 matrices.
    x1 = jax.random.normal(k1, (3, 3), dtype=jnp.float32)
    x2 = jax.random.normal(k2, (3, 3), dtype=jnp.float32)
    x3 = jax.random.normal(k3, (3, 3), dtype=jnp.float32)
    x4 = jax.random.normal(k4, (3, 3), dtype=jnp.float32)
    x5 = jax.random.normal(k5, (3, 3), dtype=jnp.float32)

    out = model_forward(x1, x2, x3, x4, x5)
    out = jax.block_until_ready(out)

    ref = model_forward_ref(x1, x2, x3, x4, x5)
    assert out.shape == (3, 3)
    assert jnp.allclose(out, ref, atol=1e-5, rtol=1e-5), "mismatch vs reference"

    print("KERNEL_OK")
</pallas_src>

<mosaic_0001>
module attributes {stable_mosaic.version = 11 : i64} {
  func.func @_fused_kernel(%arg0: memref<3x3xf32, #tpu.memory_space<vmem>>, %arg1: memref<3x3xf32, #tpu.memory_space<vmem>>, %arg2: memref<3x3xf32, #tpu.memory_space<vmem>>, %arg3: memref<3x3xf32, #tpu.memory_space<vmem>>, %arg4: memref<3x3xf32, #tpu.memory_space<vmem>>, %arg5: memref<3x3xf32, #tpu.memory_space<vmem>>) attributes {dimension_semantics = [], scalar_prefetch = 0 : i64, scratch_operands = 0 : i64, tpu.core_type = #tpu.core_type<tc>} {
    %c0 = arith.constant 0 : index
    %c0_0 = arith.constant 0 : index
    %0 = vector.load %arg0[%c0, %c0_0] : memref<3x3xf32, #tpu.memory_space<vmem>>, vector<3x3xf32>
    %c0_1 = arith.constant 0 : index
    %c0_2 = arith.constant 0 : index
    %1 = vector.load %arg1[%c0_1, %c0_2] : memref<3x3xf32, #tpu.memory_space<vmem>>, vector<3x3xf32>
    %c0_3 = arith.constant 0 : index
    %c0_4 = arith.constant 0 : index
    %2 = vector.load %arg2[%c0_3, %c0_4] : memref<3x3xf32, #tpu.memory_space<vmem>>, vector<3x3xf32>
    %c0_5 = arith.constant 0 : index
    %c0_6 = arith.constant 0 : index
    %3 = vector.load %arg3[%c0_5, %c0_6] : memref<3x3xf32, #tpu.memory_space<vmem>>, vector<3x3xf32>
    %c0_7 = arith.constant 0 : index
    %c0_8 = arith.constant 0 : index
    %4 = vector.load %arg4[%c0_7, %c0_8] : memref<3x3xf32, #tpu.memory_space<vmem>>, vector<3x3xf32>
    %5 = vector.extract_strided_slice %0 {offsets = [0, 0], sizes = [3, 1], strides = [1, 1]} : vector<3x3xf32> to vector<3x1xf32>
    %6 = vector.extract_strided_slice %1 {offsets = [0, 0], sizes = [1, 3], strides = [1, 1]} : vector<3x3xf32> to vector<1x3xf32>
    %7 = vector.broadcast %5 : vector<3x1xf32> to vector<3x3xf32>
    %8 = vector.broadcast %6 : vector<1x3xf32> to vector<3x3xf32>
    %9 = arith.mulf %7, %8 : vector<3x3xf32>
    %10 = arith.addf %4, %9 : vector<3x3xf32>
    %11 = vector.extract_strided_slice %2 {offsets = [0, 0], sizes = [3, 1], strides = [1, 1]} : vector<3x3xf32> to vector<3x1xf32>
    %12 = vector.extract_strided_slice %3 {offsets = [0, 0], sizes = [1, 3], strides = [1, 1]} : vector<3x3xf32> to vector<1x3xf32>
    %13 = vector.broadcast %11 : vector<3x1xf32> to vector<3x3xf32>
    %14 = vector.broadcast %12 : vector<1x3xf32> to vector<3x3xf32>
    %15 = arith.mulf %13, %14 : vector<3x3xf32>
    %16 = arith.addf %10, %15 : vector<3x3xf32>
    %17 = vector.extract_strided_slice %0 {offsets = [0, 1], sizes = [3, 1], strides = [1, 1]} : vector<3x3xf32> to vector<3x1xf32>
    %18 = vector.extract_strided_slice %1 {offsets = [1, 0], sizes = [1, 3], strides = [1, 1]} : vector<3x3xf32> to vector<1x3xf32>
    %19 = vector.broadcast %17 : vector<3x1xf32> to vector<3x3xf32>
    %20 = vector.broadcast %18 : vector<1x3xf32> to vector<3x3xf32>
    %21 = arith.mulf %19, %20 : vector<3x3xf32>
    %22 = arith.addf %16, %21 : vector<3x3xf32>
    %23 = vector.extract_strided_slice %2 {offsets = [0, 1], sizes = [3, 1], strides = [1, 1]} : vector<3x3xf32> to vector<3x1xf32>
    %24 = vector.extract_strided_slice %3 {offsets = [1, 0], sizes = [1, 3], strides = [1, 1]} : vector<3x3xf32> to vector<1x3xf32>
    %25 = vector.broadcast %23 : vector<3x1xf32> to vector<3x3xf32>
    %26 = vector.broadcast %24 : vector<1x3xf32> to vector<3x3xf32>
    %27 = arith.mulf %25, %26 : vector<3x3xf32>
    %28 = arith.addf %22, %27 : vector<3x3xf32>
    %29 = vector.extract_strided_slice %0 {offsets = [0, 2], sizes = [3, 1], strides = [1, 1]} : vector<3x3xf32> to vector<3x1xf32>
    %30 = vector.extract_strided_slice %1 {offsets = [2, 0], sizes = [1, 3], strides = [1, 1]} : vector<3x3xf32> to vector<1x3xf32>
    %31 = vector.broadcast %29 : vector<3x1xf32> to vector<3x3xf32>
    %32 = vector.broadcast %30 : vector<1x3xf32> to vector<3x3xf32>
    %33 = arith.mulf %31, %32 : vector<3x3xf32>
    %34 = arith.addf %28, %33 : vector<3x3xf32>
    %35 = vector.extract_strided_slice %2 {offsets = [0, 2], sizes = [3, 1], strides = [1, 1]} : vector<3x3xf32> to vector<3x1xf32>
    %36 = vector.extract_strided_slice %3 {offsets = [2, 0], sizes = [1, 3], strides = [1, 1]} : vector<3x3xf32> to vector<1x3xf32>
    %37 = vector.broadcast %35 : vector<3x1xf32> to vector<3x3xf32>
    %38 = vector.broadcast %36 : vector<1x3xf32> to vector<3x3xf32>
    %39 = arith.mulf %37, %38 : vector<3x3xf32>
    %40 = arith.addf %34, %39 : vector<3x3xf32>
    %c0_9 = arith.constant 0 : index
    %c0_10 = arith.constant 0 : index
    %41 = vector.load %arg5[%c0_9, %c0_10] : memref<3x3xf32, #tpu.memory_space<vmem>>, vector<3x3xf32>
    tpu.vector_store %arg5[%c0_9, %c0_10], %40 {strides = array<i32>} : memref<3x3xf32, #tpu.memory_space<vmem>>, vector<3x3xf32>,
    return
  }
}

</mosaic_0001>

<llo_original>
// kernel: model_forward.1
$region0: #{model_forward.1}
  #allocation0 [shape = 'u32[]', space=smem, size = 0x4, offset = 0x4, fixed_abs, tag = 'smem constant byte address 0x4 - core index']
  #allocation1 [shape = 'u32[144,128]{1,0:T(1,128)}', space=vmem, size = 0x12000, scoped, tag = 'internal scratch']
  %s0 = inlined_call_operand.hbm [shape: f32[3,3], index: 0, kind: input, shape index: {}]
  %s1 = inlined_call_operand.hbm [shape: f32[3,3], index: 1, kind: input, shape index: {}]
  %s2 = inlined_call_operand.vmem [shape: f32[3,3], index: 2, kind: input, shape index: {}]
  %s3 = inlined_call_operand.vmem [shape: f32[3,3], index: 3, kind: input, shape index: {}]
  %s4 = inlined_call_operand.vmem [shape: f32[3,3], index: 4, kind: input, shape index: {}]
  %s5 = inlined_call_operand.hbm [shape: f32[3,3], index: 5, kind: output, shape index: {}]
  %s6 = sld [smem:[#allocation0]]
  $region38: #{model_forward.1} parent=0
    _
  %s8 = ssub.s32 1, %s6
  %s9 = scalar_select 0, %s8, %s6
  $region1: #{model_forward.1} parent=0
    #allocation2 [shape = 'u8[2048]{0}', space=vmem, size = 0x800, scoped, tag = 'input window, operand 0, single buffered']
    #allocation3 [shape = 's32[1]{0}', space=sflag, size = 0x4, scoped, tag = 'scoped memory for model_forward.1']
    #allocation4 [shape = 's32[1]{0}', space=sflag, size = 0x4, scoped, tag = 'scoped memory for model_forward.1']
    #allocation5 [shape = 'u8[2048]{0}', space=vmem, size = 0x800, scoped, tag = 'input window, operand 1, single buffered']
    #allocation6 [shape = 's32[1]{0}', space=sflag, size = 0x4, scoped, tag = 'scoped memory for model_forward.1']
    #allocation7 [shape = 'u8[2048]{0}', space=vmem, size = 0x800, scoped, tag = 'output window, operand 0, single buffered']
    %10 = vsyncpa [#allocation3], 0
    %11 = vsyncpa [#allocation6], 0
    %12 = vsyncpa [#allocation4], 0
    // Predicated region
    $region2: #{model_forward.1} parent=1 // pred_check
      _
    $region3: #{model_forward.1} parent=1 // pred_check_branch
      %14 = sbr.rel (0) target = $region5
    $region4: #{model_forward.1} parent=1 // pred_region
      %s16 = ssub.s32 64, 64
      %17 = vsyncadd [#allocation3], %s16
      %s19 = sshll.u32 [#allocation2], 4
      %s20 = int_to_ptr.vmem [resolvable:$true] %s19
      %22 = dma.hbm_to_vmem [thread:$0]  %s0, 64, %s20, [#allocation3]
    $region5: #{model_forward.1} parent=1 // pred_fallthru
      _
    // Predicated region
    $region6: #{model_forward.1} parent=1 // pred_check
      _
    $region7: #{model_forward.1} parent=1 // pred_check_branch
      %24 = sbr.rel (0) target = $region9
    $region8: #{model_forward.1} parent=1 // pred_region
      %s26 = ssub.s32 64, 64
      %27 = vsyncadd [#allocation6], %s26
      %s29 = sshll.u32 [#allocation5], 4
      %s30 = int_to_ptr.vmem [resolvable:$true] %s29
      %32 = dma.hbm_to_vmem [thread:$0]  %s1, 64, %s30, [#allocation6]
    $region9: #{model_forward.1} parent=1 // pred_fallthru
      _
    // Predicated region
    $region10: #{model_forward.1} parent=1 // pred_check
      _
    $region11: #{model_forward.1} parent=1 // pred_check_branch
      %34 = sbr.rel (0) target = $region13
    $region12: #{model_forward.1} parent=1 // pred_region
      _
    $region13: #{model_forward.1} parent=1 // pred_fallthru
      _
    // Predicated region
    $region14: #{model_forward.1} parent=1 // pred_check
      _
    $region15: #{model_forward.1} parent=1 // pred_check_branch
      %36 = sbr.rel (0) target = $region17
    $region16: #{model_forward.1} parent=1 // pred_region
      _
    $region17: #{model_forward.1} parent=1 // pred_fallthru
      _
    // Predicated region
    $region18: #{model_forward.1} parent=1 // pred_check
      _
    $region19: #{model_forward.1} parent=1 // pred_check_branch
      %38 = sbr.rel (0) target = $region21
    $region20: #{model_forward.1} parent=1 // pred_region
      _
    $region21: #{model_forward.1} parent=1 // pred_fallthru
      _
    // Predicated region
    $region22: #{model_forward.1} parent=1 // pred_check
      _
    $region23: #{model_forward.1} parent=1 // pred_check_branch
      %40 = sbr.rel (0) target = $region25
    $region24: #{model_forward.1} parent=1 // pred_region
      %41 = dma.done [#allocation3], 64
    $region25: #{model_forward.1} parent=1 // pred_fallthru
      _
    // Predicated region
    $region26: #{model_forward.1} parent=1 // pred_check
      _
    $region27: #{model_forward.1} parent=1 // pred_check_branch
      %43 = sbr.rel (0) target = $region29
    $region28: #{model_forward.1} parent=1 // pred_region
      %44 = dma.done [#allocation6], 64
    $region29: #{model_forward.1} parent=1 // pred_fallthru
      _
    %v45 = vld [vmem:[#allocation2] sm:$0x7]
    %v46 = vld [vmem:[#allocation5] sm:$0x7]
    %v47 = vld [vmem:[%s2] sm:$0x7]
    %v48 = vld [vmem:[%s3] sm:$0x7]
    %v49 = vld [vmem:[%s4] sm:$0x7]
    %51 = vset.pattern.permute.xlu0 0
    %52 = vperm.xlu0 %51, %v45
    %v53 = vpop.permute.xlu0 %52
    %v55 = vlaneseq
    %v56 = vshrl.u32 %v55, 7
    %v57 = vsub.s32 0, %v56
    %v58 = vrot.slane %v46, %v57
    %v59 = vmul.f32 %v53, %v58
    %v60 = vadd.f32 %v49, %v59
    %62 = vset.pattern.permute.xlu0 0
    %63 = vperm.xlu0 %62, %v47
    %v64 = vpop.permute.xlu0 %63
    %v66 = vlaneseq
    %v67 = vshrl.u32 %v66, 7
    %v68 = vsub.s32 0, %v67
    %v69 = vrot.slane %v48, %v68
    %v70 = vmul.f32 %v64, %v69
    %v71 = vadd.f32 %v60, %v70
    %72 = vset.pattern.permute.xlu0 1
    %73 = vperm.xlu0 %72, %v45
    %v74 = vpop.permute.xlu0 %73
    %v76 = vlaneseq
    %v77 = vshrl.u32 %v76, 7
    %v78 = vsub.s32 1, %v77
    %v79 = vrot.slane %v46, %v78
    %v80 = vmul.f32 %v74, %v79
    %v81 = vadd.f32 %v71, %v80
    %82 = vset.pattern.permute.xlu0 1
    %83 = vperm.xlu0 %82, %v47
    %v84 = vpop.permute.xlu0 %83
    %v86 = vlaneseq
    %v87 = vshrl.u32 %v86, 7
    %v88 = vsub.s32 1, %v87
    %v89 = vrot.slane %v48, %v88
    %v90 = vmul.f32 %v84, %v89
    %v91 = vadd.f32 %v81, %v90
    %92 = vset.pattern.permute.xlu0 2
    %93 = vperm.xlu0 %92, %v45
    %v94 = vpop.permute.xlu0 %93
    %v96 = vlaneseq
    %v97 = vshrl.u32 %v96, 7
    %v98 = vsub.s32 2, %v97
    %v99 = vrot.slane %v46, %v98
    %v100 = vmul.f32 %v94, %v99
    %v101 = vadd.f32 %v91, %v100
    %102 = vset.pattern.permute.xlu0 2
    %103 = vperm.xlu0 %102, %v47
    %v104 = vpop.permute.xlu0 %103
    %v106 = vlaneseq
    %v107 = vshrl.u32 %v106, 7
    %v108 = vsub.s32 2, %v107
    %v109 = vrot.slane %v48, %v108
    %v110 = vmul.f32 %v104, %v109
    %v111 = vadd.f32 %v101, %v110
    %vm112 = vcmask 18432
    %113 = vst.msk [vmem:[#allocation7] sm:$0x7] %vm112, %v111
    // Predicated region
    $region30: #{model_forward.1} parent=1 // pred_check
      _
    $region31: #{model_forward.1} parent=1 // pred_check_branch
      %115 = sbr.rel (0) target = $region33
    $region32: #{model_forward.1} parent=1 // pred_region
      %s117 = ssub.s32 64, 64
      %118 = vsyncadd [#allocation4], %s117
      %s120 = sshll.u32 [#allocation7], 4
      %s121 = int_to_ptr.vmem [resolvable:$true] %s120
      %123 = dma.vmem_to_hbm [thread:$0]  %s121, 64, %s5, [#allocation4]
    $region33: #{model_forward.1} parent=1 // pred_fallthru
      _
    // Predicated region
    $region34: #{model_forward.1} parent=1 // pred_check
      _
    $region35: #{model_forward.1} parent=1 // pred_check_branch
      %125 = sbr.rel (0) target = $region37
    $region36: #{model_forward.1} parent=1 // pred_region
      %126 = dma.done [#allocation4], 64
    $region37: #{model_forward.1} parent=1 // pred_fallthru
      _
    %127 = vsyncpa [#allocation3], 1
    %128 = vsyncpa [#allocation6], 1
    %129 = vsyncpa [#allocation4], 1

</llo_original>
